<compile_context>
chip_gen: v7x
topology: tpu7x:2x2x1
jax: 0.10.0
libtpu: 0.0.40
codegen_flags: <defaults>
</compile_context>

<pallas_src>
import jax
import jax.numpy as jnp
from jax.experimental import pallas as pl
from jax.experimental.pallas import tpu as pltpu


def _round_up(x, m):
    return ((x + m - 1) // m) * m


def _pick_images_per_step(batch, n_tok, target_rows=512):
    """Largest divisor r of `batch` with r * n_tok <= target_rows, keeping at
    least 2 grid steps (megacore / v7x TC sharding) whenever batch allows."""
    best = 1
    for r in range(1, batch + 1):
        if batch % r:
            continue
        if r * n_tok > target_rows:
            break
        if batch // r >= 2 or batch == 1:
            best = r
    return best


def _patch_embed_kernel(x_ref, w_ref, pos_ref, out_ref):
    """One grid step = `r` whole images.

    x_ref:   (r, N_tok, K_pad)  bf16 patch pixels (row 0 of each image = 0)
    w_ref:   (K_pad, H_pad)     bf16 projection weight (resident, constant)
    pos_ref: (N_tok, H_pad)     f32 position table (cls row + bias folded in,
                                resident, constant block index)
    out_ref: (r, N_tok, H_pad)  bf16 token embeddings (final layout)
    """
    w = w_ref[...]
    pos = pos_ref[...]
    for i in range(x_ref.shape[0]):          # static -> unrolled MXU matmuls
        acc = jnp.dot(x_ref[i], w, preferred_element_type=jnp.float32)
        out_ref[i] = (acc + pos).astype(out_ref.dtype)


def patch_embed_pallas(patches, w2d, pos_full, images_per_step, out_dtype):
    """patches: (B, N_tok, K_pad) bf16, w2d: (K_pad, H_pad) bf16,
    pos_full: (N_tok, H_pad) f32 -> (B, N_tok, H_pad) out_dtype."""
    B, n_tok, k_pad = patches.shape
    h_pad = w2d.shape[1]
    r = images_per_step
    grid = (B // r,)

    return pl.pallas_call(
        _patch_embed_kernel,
        out_shape=jax.ShapeDtypeStruct((B, n_tok, h_pad), out_dtype),
        grid_spec=pltpu.PrefetchScalarGridSpec(
            num_scalar_prefetch=0,
            grid=grid,
            in_specs=[
                # Streamed patch rows: new block of r images every step.
                pl.BlockSpec((r, n_tok, k_pad), lambda b: (b, 0, 0)),
                # Weight: constant block index -> fetched once, VMEM resident.
                pl.BlockSpec((k_pad, h_pad), lambda b: (0, 0)),
                # Position table: constant block index -> fetched once, f32.
                pl.BlockSpec((n_tok, h_pad), lambda b: (0, 0)),
            ],
            out_specs=pl.BlockSpec((r, n_tok, h_pad), lambda b: (b, 0, 0)),
        ),
        compiler_params=pltpu.CompilerParams(
            dimension_semantics=("parallel",)),
    )(patches, w2d, pos_full)


def extract_patches(x, patch):
    """x: (B, C, H, W) NCHW -> (B, n_patches, C*patch*patch), matching
    PyTorch Conv2d(kernel=stride=patch) + flatten(2) + transpose semantics."""
    B, C, H, W = x.shape
    hp, wp = H // patch, W // patch
    x = x.reshape(B, C, hp, patch, wp, patch)
    x = jnp.transpose(x, (0, 2, 4, 1, 3, 5))              # (B, hp, wp, C, P, P)
    return x.reshape(B, hp * wp, C * patch * patch)


def embeddings_forward(x, conv_w, conv_b, cls_token, pos_emb, patch,
                       out_dtype=jnp.bfloat16):
    """Full Embeddings.forward (eval mode; dropout = identity).

    x:         (B, C, H, W)
    conv_w:    (hidden, C, P, P)   PyTorch Conv2d weight layout
    conv_b:    (hidden,)
    cls_token: (1, 1, hidden)
    pos_emb:   (1, n_patches + 1, hidden)
    returns    (B, n_patches + 1, hidden)  in `out_dtype` (default bf16)
    """
    B, C, IMG_H, IMG_W = x.shape
    hidden = conv_w.shape[0]
    K = C * patch * patch
    N = (IMG_H // patch) * (IMG_W // patch)
    n_tok = N + 1                                   # cls token + patches

    K_pad = _round_up(K, 128)                       # lane dims 128-aligned
    H_pad = _round_up(hidden, 128)                  # == hidden for ViT-B/L/H

    # Patch extraction (NCHW layout glue) fused by XLA with the bf16 cast,
    # the K-lane pad and the leading zero row (cls slot) per image.
    patches = extract_patches(x, patch).astype(jnp.bfloat16)       # (B, N, K)
    patches = jnp.pad(patches, ((0, 0), (1, 0), (0, K_pad - K)))   # (B,n_tok,K_pad)

    # Conv weight as a dense (K, H) bf16 projection, zero-padded.
    w2d = conv_w.reshape(hidden, K).T.astype(jnp.bfloat16)         # (K, H)
    w2d = jnp.pad(w2d, ((0, K_pad - K), (0, H_pad - hidden)))

    # f32 position table, VMEM-resident in the kernel:
    #   row 0:    cls_token + pos_emb[:, 0]   (no conv bias: zero patch row)
    #   rows 1..: pos_emb[:, 1:] + conv_b
    pos_cls = cls_token[0] + pos_emb[0, 0:1, :]                    # (1, H)
    pos_patch = pos_emb[0, 1:, :] + conv_b[None, :]                # (N, H)
    pos_full = jnp.concatenate([pos_cls, pos_patch], axis=0)       # (n_tok, H)
    pos_full = jnp.pad(pos_full, ((0, 0), (0, H_pad - hidden)))
    pos_full = pos_full.astype(jnp.float32)

    r = _pick_images_per_step(B, n_tok)
    out = patch_embed_pallas(patches, w2d, pos_full, r, out_dtype)  # (B,n_tok,H_pad)

    if H_pad != hidden:        # only hit by toy configs; ViT hidden is aligned
        out = out[:, :, :hidden]
    return out


if __name__ == "__main__":
    # Small config: img 16x16, patch 4 -> 16 patches, hidden 32, 3 channels.
    B, C, IMG, P, HIDDEN = 2, 3, 16, 4, 32
    N = (IMG // P) * (IMG // P)
    K = C * P * P

    key = jax.random.PRNGKey(0)
    k1, k2, k3, k4, k5 = jax.random.split(key, 5)
    x = jax.random.normal(k1, (B, C, IMG, IMG), jnp.float32)
    conv_w = jax.random.normal(k2, (HIDDEN, C, P, P), jnp.float32) * 0.02
    conv_b = jax.random.normal(k3, (HIDDEN,), jnp.float32) * 0.02
    cls_token = jax.random.normal(k4, (1, 1, HIDDEN), jnp.float32) * 0.02
    pos_emb = jax.random.normal(k5, (1, N + 1, HIDDEN), jnp.float32) * 0.02

    out = embeddings_forward(x, conv_w, conv_b, cls_token, pos_emb, P)
    out = jax.block_until_ready(out)
    assert out.shape == (B, N + 1, HIDDEN), out.shape
    assert out.dtype == jnp.bfloat16, out.dtype

    # Pure-JAX reference with the same bf16-rounded GEMM operands
    # (f32 accumulation); final comparison in f32 against the bf16 output.
    patches_ref = extract_patches(x, P)
    pb = patches_ref.astype(jnp.bfloat16).astype(jnp.float32)
    wb = conv_w.reshape(HIDDEN, K).T.astype(jnp.bfloat16).astype(jnp.float32)
    ref_tokens = jnp.einsum("bnk,kh->bnh", pb, wb) + conv_b[None, None, :]
    ref = jnp.concatenate(
        [jnp.broadcast_to(cls_token, (B, 1, HIDDEN)), ref_tokens], axis=1)
    ref = ref + pos_emb
    err = float(jnp.max(jnp.abs(out.astype(jnp.float32) - ref)))
    assert err < 1e-2, err

    print("KERNEL_OK")
</pallas_src>

<mosaic_0001>
module attributes {stable_mosaic.version = 11 : i64} {
  func.func @_patch_embed_kernel(%arg0: i32, %arg1: memref<1x17x128xbf16, #tpu.memory_space<vmem>>, %arg2: memref<128x128xbf16, #tpu.memory_space<vmem>>, %arg3: memref<17x128xf32, #tpu.memory_space<vmem>>, %arg4: memref<1x17x128xbf16, #tpu.memory_space<vmem>>) attributes {dimension_semantics = [#tpu.dimension_semantics<parallel>], iteration_bounds = array<i64: 2>, scalar_prefetch = 0 : i64, scratch_operands = 0 : i64, tpu.core_type = #tpu.core_type<tc>, window_params = [{transform_indices = @transform_0, window_bounds = array<i64: 1, 17, 128>}, {pipeline_mode = #tpu.pipeline_mode<synchronous>, transform_indices = @transform_1, window_bounds = array<i64: 128, 128>}, {pipeline_mode = #tpu.pipeline_mode<synchronous>, transform_indices = @transform_2, window_bounds = array<i64: 17, 128>}, {transform_indices = @transform_3, window_bounds = array<i64: 1, 17, 128>}]} {
    %c0 = arith.constant 0 : index
    %c0_0 = arith.constant 0 : index
    %0 = vector.load %arg2[%c0, %c0_0] : memref<128x128xbf16, #tpu.memory_space<vmem>>, vector<128x128xbf16>
    %c0_1 = arith.constant 0 : index
    %c0_2 = arith.constant 0 : index
    %1 = vector.load %arg3[%c0_1, %c0_2] : memref<17x128xf32, #tpu.memory_space<vmem>>, vector<17x128xf32>
    %c0_3 = arith.constant 0 : index
    %c0_4 = arith.constant 0 : index
    %c0_5 = arith.constant 0 : index
    %2 = vector.load %arg1[%c0_3, %c0_4, %c0_5] : memref<1x17x128xbf16, #tpu.memory_space<vmem>>, vector<1x17x128xbf16>
    %3 = vector.shape_cast %2 : vector<1x17x128xbf16> to vector<17x128xbf16>
    %cst = arith.constant dense<0.000000e+00> : vector<17x128xf32>
    %4 = tpu.matmul %3, %0, %cst {dimension_numbers = #tpu.dot_dimension_numbers<[1], [0], [0], [1], [0, 0, 1, 1], [], []>} : vector<17x128xbf16>, vector<128x128xbf16>, vector<17x128xf32> -> vector<17x128xf32>
    %5 = arith.addf %4, %1 : vector<17x128xf32>
    %6 = arith.truncf %5 : vector<17x128xf32> to vector<17x128xbf16>
    %c0_6 = arith.constant 0 : index
    %c0_7 = arith.constant 0 : index
    %c0_8 = arith.constant 0 : index
    %7 = vector.load %arg4[%c0_6, %c0_7, %c0_8] : memref<1x17x128xbf16, #tpu.memory_space<vmem>>, vector<1x17x128xbf16>
    %8 = vector.shape_cast %7 : vector<1x17x128xbf16> to vector<17x128xbf16>
    %9 = vector.shape_cast %6 : vector<17x128xbf16> to vector<1x17x128xbf16>
    tpu.vector_store %arg4[%c0_6, %c0_7, %c0_8], %9 {strides = array<i32>} : memref<1x17x128xbf16, #tpu.memory_space<vmem>>, vector<1x17x128xbf16>,
    return
  }
  func.func @transform_0(%arg0: i32) -> (i32, i32, i32) {
    %c0_i32 = arith.constant 0 : i32
    %c0_i32_0 = arith.constant 0 : i32
    %c0_i32_1 = arith.constant 0 : i32
    return %arg0, %c0_i32, %c0_i32_0 : i32, i32, i32
  }
  func.func @transform_1(%arg0: i32) -> (i32, i32) {
    %c0_i32 = arith.constant 0 : i32
    %c0_i32_0 = arith.constant 0 : i32
    %c0_i32_1 = arith.constant 0 : i32
    return %c0_i32, %c0_i32_0 : i32, i32
  }
  func.func @transform_2(%arg0: i32) -> (i32, i32) {
    %c0_i32 = arith.constant 0 : i32
    %c0_i32_0 = arith.constant 0 : i32
    %c0_i32_1 = arith.constant 0 : i32
    return %c0_i32, %c0_i32_0 : i32, i32
  }
  func.func @transform_3(%arg0: i32) -> (i32, i32, i32) {
    %c0_i32 = arith.constant 0 : i32
    %c0_i32_0 = arith.constant 0 : i32
    %c0_i32_1 = arith.constant 0 : i32
    return %arg0, %c0_i32, %c0_i32_0 : i32, i32, i32
  }
}

</mosaic_0001>

<llo_original>
// kernel: tpu_custom_call.1
$region0: #{tpu_custom_call.1}
  #allocation0 [shape = 'u32[]', space=smem, size = 0x4, offset = 0x4, fixed_abs, tag = 'smem constant byte address 0x4 - core index']
  #allocation1 [shape = 'u32[144,128]{1,0:T(1,128)}', space=vmem, size = 0x12000, scoped, tag = 'internal scratch']
  %s0 = inlined_call_operand.vmem [shape: bf16[2,17,128], index: 0, kind: input, shape index: {}]
  %s1 = inlined_call_operand.hbm [shape: bf16[128,128], index: 1, kind: input, shape index: {}]
  %s2 = inlined_call_operand.vmem [shape: f32[17,128], index: 2, kind: input, shape index: {}]
  %s3 = inlined_call_operand.vmem [shape: bf16[2,17,128], index: 3, kind: output, shape index: {}]
  %s4 = sld [smem:[#allocation0]]
  $region49: #{tpu_custom_call.1} parent=0
    _
  %s6 = ssub.s32 1, %s4
  %s7 = scalar_select 0, %s6, %s4
  $region1: #{tpu_custom_call.1} parent=0
    #allocation2 [shape = 'u8[32768]{0}', space=vmem, size = 0x8000, scoped, tag = 'input window, operand 1, single buffered']
    #allocation3 [shape = 's32[2]{0}', space=sflag, size = 0x8, scoped, tag = 'scoped memory for tpu_custom_call.1']
    %8 = vsyncpa [#allocation3], 0
    loop: start=0, step=1, limit=4
    $region2: #{tpu_custom_call.1} parent=1 // loop_pre_header
      _
    $region3: #{tpu_custom_call.1} parent=1 // loop_header
      %s10 = sphi 0, %s14
      %p11 = scmp.ge.s32.totalorder %s10, 4
      %s20 = sphi 0, %s22
      %s23 = sphi 0, %s20
      %s24 = sphi 0, %s23
      %s40 = sphi 0, %s24
      %s44 = sphi 0, %s44
      %s46 = sphi 0, %s44
      %s47 = sphi 0, %s46
      %s61 = sphi 0, %s47
      %s65 = sphi 0, %s65
      %s67 = sphi 0, %s65
      %s68 = sphi 0, %s67
      %s82 = sphi 0, %s68
      %s88 = sphi 0, %s90
      %s91 = sphi 0, %s88
      %s92 = sphi 0, %s91
      %s108 = sphi 0, %s92
    $region4: #{tpu_custom_call.1} parent=1 // loop_header_branch
      %13 = sbr.rel (%p11) target = $region8
    $region5: #{tpu_custom_call.1} parent=1 // loop_body
      %s15 = ssub.s32 %s10, 1
      %s16 = ssub.s32 %s10, 2
      %s17 = sadd.s32 %s10, 1
      %s18 = ssub.s32 %s10, %s17
      %p19 = scmp.eq.s32.totalorder %s18, 0
      %s21 = sadd.s32 %s20, 1
      %s22 = scalar_select %p19, %s20, %s21
      %p25 = pneg %p19
      %p26 = scmp.eq.s32.totalorder %s10, 1
      %p27 = por %p25, %p26
      %p28 = scmp.ne.s32.totalorder %s20, %s23
      %p29 = scmp.eq.s32.totalorder %s10, 0
      %p30 = por %p28, %p29
      %p31 = scmp.ne.s32.totalorder %s20, %s23
      %p32 = scmp.eq.s32.totalorder %s15, 1
      %p33 = por %p31, %p32
      %p34 = scmp.ne.s32.totalorder %s23, %s24
      %p35 = scmp.eq.s32.totalorder %s15, 0
      %p36 = por %p34, %p35
      %p37 = scmp.ne.s32.totalorder %s23, %s24
      %p38 = scmp.eq.s32.totalorder %s16, 1
      %p39 = por %p37, %p38
      %p41 = scmp.ne.s32.totalorder %s24, %s40
      %p42 = scmp.eq.s32.totalorder %s16, 0
      %p43 = por %p41, %p42
      %s45 = sadd.s32 %s44, 1
      %p48 = scmp.eq.s32.totalorder %s10, 1
      %p49 = scmp.ne.s32.totalorder %s44, %s46
      %p50 = scmp.eq.s32.totalorder %s10, 0
      %p51 = por %p49, %p50
      %p52 = scmp.ne.s32.totalorder %s44, %s46
      %p53 = scmp.eq.s32.totalorder %s15, 1
      %p54 = por %p52, %p53
      %p55 = scmp.ne.s32.totalorder %s46, %s47
      %p56 = scmp.eq.s32.totalorder %s15, 0
      %p57 = por %p55, %p56
      %p58 = scmp.ne.s32.totalorder %s46, %s47
      %p59 = scmp.eq.s32.totalorder %s16, 1
      %p60 = por %p58, %p59
      %p62 = scmp.ne.s32.totalorder %s47, %s61
      %p63 = scmp.eq.s32.totalorder %s16, 0
      %p64 = por %p62, %p63
      %s66 = sadd.s32 %s65, 1
      %p69 = scmp.eq.s32.totalorder %s10, 1
      %p70 = scmp.ne.s32.totalorder %s65, %s67
      %p71 = scmp.eq.s32.totalorder %s10, 0
      %p72 = por %p70, %p71
      %p73 = scmp.ne.s32.totalorder %s65, %s67
      %p74 = scmp.eq.s32.totalorder %s15, 1
      %p75 = por %p73, %p74
      %p76 = scmp.ne.s32.totalorder %s67, %s68
      %p77 = scmp.eq.s32.totalorder %s15, 0
      %p78 = por %p76, %p77
      %p79 = scmp.ne.s32.totalorder %s67, %s68
      %p80 = scmp.eq.s32.totalorder %s16, 1
      %p81 = por %p79, %p80
      %p83 = scmp.ne.s32.totalorder %s68, %s82
      %p84 = scmp.eq.s32.totalorder %s16, 0
      %p85 = por %p83, %p84
      %s86 = ssub.s32 %s10, %s17
      %p87 = scmp.eq.s32.totalorder %s86, 0
      %s89 = sadd.s32 %s88, 1
      %s90 = scalar_select %p87, %s88, %s89
      %p93 = pneg %p87
      %p94 = scmp.eq.s32.totalorder %s10, 1
      %p95 = por %p93, %p94
      %p96 = scmp.ne.s32.totalorder %s88, %s91
      %p97 = scmp.eq.s32.totalorder %s10, 0
      %p98 = por %p96, %p97
      %p99 = scmp.ne.s32.totalorder %s88, %s91
      %p100 = scmp.eq.s32.totalorder %s15, 1
      %p101 = por %p99, %p100
      %p102 = scmp.ne.s32.totalorder %s91, %s92
      %p103 = scmp.eq.s32.totalorder %s15, 0
      %p104 = por %p102, %p103
      %p105 = scmp.ne.s32.totalorder %s91, %s92
      %p106 = scmp.eq.s32.totalorder %s16, 1
      %p107 = por %p105, %p106
      %p109 = scmp.ne.s32.totalorder %s92, %s108
      %p110 = scmp.eq.s32.totalorder %s16, 0
      %p111 = por %p109, %p110
      %p112 = scmp.le.s32.totalorder 1, %s10
      %p113 = scmp.lt.s32.totalorder %s10, 3
      %p114 = pnand %p112, %p113
      %p115 = pneg %p114
      // Predicated region
      $region9: #{tpu_custom_call.1} parent=5 // pred_check
        _
      $region10: #{tpu_custom_call.1} parent=5 // pred_check_branch
        %117 = sbr.rel (%p114) target = $region12
      $region11: #{tpu_custom_call.1} parent=5 // pred_region
        %s118 = ssub.s32 %s10, 1
        // Predicated region
        $region13: #{tpu_custom_call.1} parent=11 // pred_check
          %p119 = pneg %p57
        $region14: #{tpu_custom_call.1} parent=11 // pred_check_branch
          %121 = sbr.rel (%p119) target = $region16
        $region15: #{tpu_custom_call.1} parent=11 // pred_region
          %s123 = ssub.s32 1024, 1024
          %124 = vsyncadd [#allocation3], %s123
          %s125 = sshll.u32 [#allocation2], 4
          %s126 = int_to_ptr.vmem [resolvable:$true] %s125
          %131 = dma.hbm_to_vmem [thread:$0]  %s1, 1024, %s126, [#allocation3], 64, 64, 4
        $region16: #{tpu_custom_call.1} parent=11 // pred_fallthru
          _
        // Predicated region
        $region17: #{tpu_custom_call.1} parent=11 // pred_check
          %p132 = pneg %p78
        $region18: #{tpu_custom_call.1} parent=11 // pred_check_branch
          %134 = sbr.rel (%p132) target = $region20
        $region19: #{tpu_custom_call.1} parent=11 // pred_region
          _
        $region20: #{tpu_custom_call.1} parent=11 // pred_fallthru
          _
      $region12: #{tpu_custom_call.1} parent=5 // pred_fallthru
        _
      %p135 = scmp.lt.s32.totalorder %s10, 2
      // Predicated region
      $region21: #{tpu_custom_call.1} parent=5 // pred_check
        %p136 = pneg %p135
      $region22: #{tpu_custom_call.1} parent=5 // pred_check_branch
        %138 = sbr.rel (%p136) target = $region24
      $region23: #{tpu_custom_call.1} parent=5 // pred_region
        // Predicated region
        $region25: #{tpu_custom_call.1} parent=23 // pred_check
          %p139 = pneg %p30
        $region26: #{tpu_custom_call.1} parent=23 // pred_check_branch
          %141 = sbr.rel (%p139) target = $region28
        $region27: #{tpu_custom_call.1} parent=23 // pred_region
          %p142 = scmp.lt.s32.totalorder %s10, 1
          %s143 = scalar_select %p142, %s10, 1
          %s144 = smul.addr %s143, 3
          %s145 = smul.addr %s144, 4
          %s146 = scalar_lea.vmem %s0, %s145
        $region28: #{tpu_custom_call.1} parent=23 // pred_fallthru
          _
      $region24: #{tpu_custom_call.1} parent=5 // pred_fallthru
        _
      %p147 = scmp.le.s32.totalorder 1, %s10
      %p148 = scmp.lt.s32.totalorder %s10, 3
      %p149 = pnand %p147, %p148
      %p150 = pneg %p149
      // Predicated region
      $region29: #{tpu_custom_call.1} parent=5 // pred_check
        _
      $region30: #{tpu_custom_call.1} parent=5 // pred_check_branch
        %152 = sbr.rel (%p149) target = $region32
      $region31: #{tpu_custom_call.1} parent=5 // pred_region
        %s153 = ssub.s32 %s10, 1
        // Predicated region
        $region33: #{tpu_custom_call.1} parent=31 // pred_check
          %p154 = pneg %p57
        $region34: #{tpu_custom_call.1} parent=31 // pred_check_branch
          %156 = sbr.rel (%p154) target = $region36
        $region35: #{tpu_custom_call.1} parent=31 // pred_region
          %157 = dma.done [#allocation3], 1024
        $region36: #{tpu_custom_call.1} parent=31 // pred_fallthru
          _
        %p158 = scmp.lt.s32.totalorder %s15, 1
        %s159 = scalar_select %p158, %s15, 1
        %s160 = smul.addr %s159, 3
        %s161 = smul.addr %s160, 4
        %s162 = scalar_lea.vmem %s0, %s161
        %p163 = pneg %p36
        %p164 = pneg %p33
        %p165 = pneg %p57
        %p166 = pneg %p54
        %p167 = pneg %p78
        %p168 = pneg %p75
        %p169 = pneg %p104
        %p170 = pneg %p101
        %p171 = scmp.lt.s32.totalorder %s15, 1
        %s172 = scalar_select %p171, %s15, 1
        %s173 = smul.addr %s172, 3
        %s174 = smul.addr %s173, 4
        %s175 = scalar_lea.vmem %s3, %s174
        %p176 = scmp.lt.s32.totalorder %s15, 1
        %s177 = scalar_select %p176, %s15, 1
        %s178 = smul.addr %s177, 3
        %s179 = smul.addr %s178, 4
        %s180 = scalar_lea.vmem %s0, %s179
        %p181 = scmp.lt.s32.totalorder %s15, 1
        %s182 = scalar_select %p181, %s15, 1
        %s183 = smul.addr %s182, 3
        %s184 = smul.addr %s183, 4
        %s185 = scalar_lea.vmem %s3, %s184
        %v187 = vld [vmem:[#allocation2] sm:$0xf]
        %v188 = vld [vmem:[#allocation2 + $0x4] sm:$0xf]
        %v189 = vld [vmem:[#allocation2 + $0x8] sm:$0xf]
        %v190 = vld [vmem:[#allocation2 + $0xc] sm:$0xf]
        %v191 = vld [vmem:[#allocation2 + $0x10] sm:$0xf]
        %v192 = vld [vmem:[#allocation2 + $0x14] sm:$0xf]
        %v193 = vld [vmem:[#allocation2 + $0x18] sm:$0xf]
        %v194 = vld [vmem:[#allocation2 + $0x1c] sm:$0xf]
        %v195 = vld [vmem:[#allocation2 + $0x20] sm:$0xf]
        %v196 = vld [vmem:[#allocation2 + $0x24] sm:$0xf]
        %v197 = vld [vmem:[#allocation2 + $0x28] sm:$0xf]
        %v198 = vld [vmem:[#allocation2 + $0x2c] sm:$0xf]
        %v199 = vld [vmem:[#allocation2 + $0x30] sm:$0xf]
        %v200 = vld [vmem:[#allocation2 + $0x34] sm:$0xf]
        %v201 = vld [vmem:[#allocation2 + $0x38] sm:$0xf]
        %v202 = vld [vmem:[#allocation2 + $0x3c] sm:$0xf]
        %v203 = vld [vmem:[%s2] sm:$0xff]
        %v204 = vld [vmem:[%s2 + $0x8] sm:$0xff]
        %v205 = vld [vmem:[%s2 + $0x10] sm:$0x1]
        %v206 = vld [vmem:[%s180] sm:$0xf]
        %v207 = vld [vmem:[%s180 + $0x4] sm:$0xf]
        %v208 = vld [vmem:[%s180 + $0x8] sm:$0x1]
        %v212 = vunpack.c.l.b16 %v206
        %v213 = vunpack.c.l.b16 %v207
        %v214 = vunpack.c.l.b16 %v208
        %v215 = vpack.c.b16 %v213, %v212
        %v216 = vpack.c.b16 %v214, %v214
        %v235 = vunpack.c.l.b16 %v187
        %v236 = vunpack.c.l.b16 %v188
        %v237 = vunpack.c.l.b16 %v189
        %v238 = vunpack.c.l.b16 %v190
        %v239 = vunpack.c.l.b16 %v191
        %v240 = vunpack.c.l.b16 %v192
        %v241 = vunpack.c.l.b16 %v193
        %v242 = vunpack.c.l.b16 %v194
        %v243 = vunpack.c.l.b16 %v195
        %v244 = vunpack.c.l.b16 %v196
        %v245 = vunpack.c.l.b16 %v197
        %v246 = vunpack.c.l.b16 %v198
        %v247 = vunpack.c.l.b16 %v199
        %v248 = vunpack.c.l.b16 %v200
        %v249 = vunpack.c.l.b16 %v201
        %v250 = vunpack.c.l.b16 %v202
        %v251 = vpack.c.b16 %v236, %v235
        %v252 = vpack.c.b16 %v238, %v237
        %v253 = vpack.c.b16 %v240, %v239
        %v254 = vpack.c.b16 %v242, %v241
        %v255 = vpack.c.b16 %v244, %v243
        %v256 = vpack.c.b16 %v246, %v245
        %v257 = vpack.c.b16 %v248, %v247
        %v258 = vpack.c.b16 %v250, %v249
        %267 = vmatprep.subr.bf16.mxu0 0
        %268 = vmatpush1.bf16.msra.mxu0 %v251
        %269 = vmatprep.subr.bf16.mxu0 0
        %270 = vmatpush1.bf16.msra.mxu0 %v252
        %271 = vmatprep.subr.bf16.mxu0 0
        %272 = vmatpush1.bf16.msra.mxu0 %v253
        %273 = vmatprep.subr.bf16.mxu0 0
        %274 = vmatpush1.bf16.msra.mxu0 %v254
        %275 = vmatprep.subr.bf16.mxu0 0
        %276 = vmatpush1.bf16.msra.mxu0 %v255
        %277 = vmatprep.subr.bf16.mxu0 0
        %278 = vmatpush1.bf16.msra.mxu0 %v256
        %279 = vmatprep.subr.bf16.mxu0 0
        %280 = vmatpush1.bf16.msra.mxu0 %v257
        %281 = vmatprep.subr.bf16.mxu0 0
        %282 = vmatpush1.bf16.msra.mxu0 %v258
        %283 = vmatprep.subr.bf16.mxu0 0
        %284 = vmatpush1.bf16.msra.mxu0 0
        %285 = vmatprep.subr.bf16.mxu0 0
        %286 = vmatpush1.bf16.msra.mxu0 0
        %287 = vmatprep.subr.bf16.mxu0 0
        %288 = vmatpush1.bf16.msra.mxu0 0
        %289 = vmatprep.subr.bf16.mxu0 0
        %290 = vmatpush1.bf16.msra.mxu0 0
        %291 = vmatprep.subr.bf16.mxu0 0
        %292 = vmatpush1.bf16.msra.mxu0 0
        %293 = vmatprep.subr.bf16.mxu0 0
        %294 = vmatpush1.bf16.msra.mxu0 0
        %295 = vmatprep.subr.bf16.mxu0 0
        %296 = vmatpush1.bf16.msra.mxu0 0
        %297 = vmatprep.subr.bf16.mxu0 0
        %298 = vmatpush1.bf16.msra.mxu0 0
        %299 = vmatprep.mubr.bf16.mxu0 0
        %300 = vmatmul.mubr.bf16.gmra.mrb[0].mxu0 %v215
        %v301 = vpop.f32.mrb[0].mxu0
        %v302 = vadd.f32 %v203, %v301
        %v303 = vpop.f32.mrb[0].mxu0
        %v304 = vpop.f32.mrb[0].mxu0
        %v305 = vadd.f32 %v204, %v304
        %v306 = vpop.f32.mrb[0].mxu0
        %307 = vmatprep.mubr.bf16.mxu0 0
        %308 = vmatmul.mubr.bf16.gmra.mrb[0].mxu0 %v216
        %v309 = vpop.f32.mrb[0].mxu0
        %v310 = vadd.f32 %v205, %v309
        %v311 = vpop.f32.mrb[0].mxu0
        %v312 = vpop.f32.mrb[0].mxu0
        %v313 = vpop.f32.mrb[0].mxu0
        %314 = vdwg.mxu0
        %v315 = vpack.c.bf16 %v305, %v302
        %v316 = vpack.c.bf16 %v310, %v310
        %v319 = vunpack.c.l.b16 %v315
        %v320 = vunpack.c.h.b16 %v315
        %v321 = vunpack.c.l.b16 %v316
        %v322 = vpack.c.b16 %v319, %v319
        %v323 = vpack.c.b16 %v320, %v320
        %v324 = vpack.c.b16 %v321, %v321
        %328 = vst [vmem:[%s185] sm:$0xf] %v322
        %329 = vst [vmem:[%s185 + $0x4] sm:$0xf] %v323
        %vm330 = vcmask 1040384
        %vm331 = vsmask.f32 256
        %vm332 = vmand %vm330, %vm331
        %v333 = vld [vmem:[%s185 + $0x8] sm:$0x1]
        %v334 = vsel %vm332, %v324, %v333
        %335 = vst [vmem:[%s185 + $0x8] sm:$0x1] %v334
        %p336 = scmp.lt.s32.totalorder %s15, 1
        %s337 = scalar_select %p336, %s15, 1
        %s338 = smul.addr %s337, 3
        %s339 = smul.addr %s338, 4
        %s340 = scalar_lea.vmem %s3, %s339
        // Predicated region
        $region37: #{tpu_custom_call.1} parent=31 // pred_check
          %p341 = pneg %p101
        $region38: #{tpu_custom_call.1} parent=31 // pred_check_branch
          %343 = sbr.rel (%p341) target = $region40
        $region39: #{tpu_custom_call.1} parent=31 // pred_region
          _
        $region40: #{tpu_custom_call.1} parent=31 // pred_fallthru
          _
      $region32: #{tpu_custom_call.1} parent=5 // pred_fallthru
        _
      %p344 = scmp.le.s32.totalorder 2, %s10
      // Predicated region
      $region41: #{tpu_custom_call.1} parent=5 // pred_check
        %p345 = pneg %p344
      $region42: #{tpu_custom_call.1} parent=5 // pred_check_branch
        %347 = sbr.rel (%p345) target = $region44
      $region43: #{tpu_custom_call.1} parent=5 // pred_region
        %s348 = ssub.s32 %s10, 2
        // Predicated region
        $region45: #{tpu_custom_call.1} parent=43 // pred_check
          %p349 = pneg %p107
        $region46: #{tpu_custom_call.1} parent=43 // pred_check_branch
          %351 = sbr.rel (%p349) target = $region48
        $region47: #{tpu_custom_call.1} parent=43 // pred_region
          %p352 = scmp.lt.s32.totalorder %s16, 1
          %s353 = scalar_select %p352, %s16, 1
          %s354 = smul.addr %s353, 3
          %s355 = smul.addr %s354, 4
          %s356 = scalar_lea.vmem %s3, %s355
        $region48: #{tpu_custom_call.1} parent=43 // pred_fallthru
          _
      $region44: #{tpu_custom_call.1} parent=5 // pred_fallthru
        _
    $region6: #{tpu_custom_call.1} parent=1 // loop_footer
      %s14 = sadd.s32 1, %s10
    $region7: #{tpu_custom_call.1} parent=1 // loop_footer_branch
      %9 = sbr.rel target = $region3
    $region8: #{tpu_custom_call.1} parent=1 // loop_exit
      _
    %357 = vsyncpa [#allocation3], 1
    %s358 = scalar_lea.sflag [#allocation3], 1
    %359 = vsyncpa %s358, 1

</llo_original>
